<compile_context>
chip_gen: v6e
topology: v6e:2x2x1
jax: 0.10.0
libtpu: 0.0.40
codegen_flags: <defaults>
</compile_context>

<pallas_src>
import functools
import math

import numpy as np
import jax
import jax.numpy as jnp
from jax.experimental import pallas as pl
from jax.experimental.pallas import tpu as pltpu


def _full_spec(shape):
    # full-array block; works with a grid-less pallas_call
    return pl.BlockSpec(shape, lambda *_: (0,) * len(shape))


def _attention_roll_shifts(d):
    """Resolve pltpu.roll's shift convention once (tiny probe kernel) and return
    the static lane shifts that bring the K / V blocks of the fused [Q|K|V|0]
    slab onto Q's lanes.  Guards against convention changes across jax versions."""
    def probe(x_ref, o_ref):
        o_ref[...] = pltpu.roll(x_ref[...], 1, axis=1)

    x = jnp.tile(jnp.arange(128, dtype=jnp.float32)[None, :], (8, 1))
    y = pl.pallas_call(probe, out_shape=jax.ShapeDtypeStruct((8, 128), jnp.float32))(x)
    np_like = bool(y[0, 1] == x[0, 0])            # np.roll: element i -> i + shift
    if np_like:
        return (128 - d) % 128, (128 - 2 * d) % 128
    return d % 128, (2 * d) % 128


# ----------------------------------------------------------------------------
# fused kernel
# ----------------------------------------------------------------------------
def _vit_ae_fused_kernel(
    x_aug_ref, w_embed_ref, ln_ref,
    wqkv_ref, bqkv_ref, wo_ref, bo_ref,
    w1_ref, b1_ref, w2_ref, b2_ref,
    w2_last_ref, b2_last_ref,
    scatter_ref, a_ref, hmask_ref,
    out_ref,
    *, num_heads, num_enc_layers, seq_enc, seq_dec, batch, k_shift, v_shift,
):
    f32, bf16 = jnp.float32, jnp.bfloat16
    D = w_embed_ref.shape[1]
    H = num_heads
    scale = 1.0 / math.sqrt(D // H)
    L = wqkv_ref.shape[0]
    M1 = x_aug_ref.shape[0]               # B * num_patches
    M2 = a_ref.shape[0]                   # B * (num_patches + spatial_res**2)

    def mm(a, b):                          # MXU: bf16 inputs, f32 accumulate
        return jnp.dot(a.astype(bf16), b.astype(bf16), preferred_element_type=f32)

    def mm_nt(a, b):                       # a @ b.T without materializing b.T
        return jax.lax.dot_general(a.astype(bf16), b.astype(bf16),
                                   (((1,), (1,)), ((), ())),
                                   preferred_element_type=f32)

    ln_w = ln_ref[0:1, :]                  # (1, D) lane broadcasts (not materialized)
    ln_b = ln_ref[1:2, :]

    def layer_norm(v):
        mu = jnp.mean(v, axis=-1, keepdims=True)
        var = jnp.mean(jnp.square(v - mu), axis=-1, keepdims=True)
        return (v - mu) * jax.lax.rsqrt(var + 1e-5) * ln_w + ln_b

    def gelu(v):
        # TODO(synk): tanh-approx GELU; exact-erf nn.GELU differs at ~1e-3 level.
        return 0.5 * v * (1.0 + jnp.tanh(
            0.7978845608028654 * (v + 0.044715 * v * v * v)))

    def block_bias(m, s):
        # Batch-block-diagonal additive mask from iota compares (threshold sums,
        # no s32 division) -- nothing O(B^2) is DMA'd or kept resident in VMEM.
        r = jax.lax.broadcasted_iota(jnp.int32, (m, m), 0)
        c = jax.lax.broadcasted_iota(jnp.int32, (m, m), 1)
        rb = jnp.zeros((m, m), jnp.int32)
        cb = jnp.zeros((m, m), jnp.int32)
        for b in range(1, batch):
            rb = rb + (r >= b * s).astype(jnp.int32)
            cb = cb + (c >= b * s).astype(jnp.int32)
        return jnp.where(rb == cb, 0.0, -1e30).astype(f32)

    def tfm_layer(x, l, bias, w2, b2):
        """x <- FFN(LN(MHSA(LN(x)))); batch folded into rows."""
        xn = layer_norm(x)
        qkv = mm(xn, wqkv_ref[l]) + bqkv_ref[l]       # (M, 128) = [Q | K | V | 0]
        k_al = pltpu.roll(qkv, k_shift, axis=1)       # K -> lanes [0, D)
        v_al = pltpu.roll(qkv, v_shift, axis=1)       # V -> lanes [0, D)
        attn = None
        for h in range(H):                            # static head loop, no slicing
            hm = hmask_ref[h]                         # (1, 128) 0/1 head mask
            s = mm_nt(qkv, k_al * hm) * scale + bias  # batch-block-diagonal bias
            s = s - jnp.max(s, axis=-1, keepdims=True)
            p = jnp.exp(s)
            p = p * pl.reciprocal(jnp.sum(p, axis=-1, keepdims=True), approx=True)
            pv = mm(p, v_al * hm)                     # lands in head-h lanes
            attn = pv if attn is None else attn + pv
        y = mm(attn, wo_ref[l]) + bo_ref[l]           # (M, D)
        yn = layer_norm(y)
        h1 = gelu(mm(yn, w1_ref[l]) + b1_ref[l])
        return mm(h1, w2) + b2

    # ---- patch embed + patch bias + positional embed: ONE matmul (host-folded) ----
    x = mm(x_aug_ref[...], w_embed_ref[...])          # (M1, D)

    # ---- encoder ----
    bias_e = block_bias(M1, seq_enc)
    for l in range(num_enc_layers):
        # NOTE: the last encoder layer's w2/b2 were pre-multiplied host-side by
        # (bottleneck_w @ decoder_embed_w), so after this loop `x` is already the
        # bottleneck + decoder-embed projection of the encoder output.
        x = tfm_layer(x, l, bias_e, w2_ref[l], b2_ref[l])

    # ---- avg-pool + decoder-token/pos + concat + decoder_embed: 1 matmul + 1 add ----
    xc = mm(scatter_ref[...], x) + a_ref[...]         # (M2, D)

    # ---- decoder ----
    bias_d = block_bias(M2, seq_dec)
    for l in range(num_enc_layers, L - 1):
        xc = tfm_layer(xc, l, bias_d, w2_ref[l], b2_ref[l])
    # last decoder layer: w2/b2 zero-padded to 128 lanes -> lane-dense epilogue
    xc = tfm_layer(xc, L - 1, bias_d, w2_last_ref[...], b2_last_ref[...])

    out_ref[...] = xc                                 # (M2, 128) unmasked 128-lane vst


# ----------------------------------------------------------------------------
# host-side constant folding (done ONCE, outside the jitted forward)
# ----------------------------------------------------------------------------
def prepare_params(params, cfg, batch):
    D = cfg["hidden_dim"]
    H = cfg["num_heads"]
    dh = D // H
    sr = cfg["spatial_res"]
    hg = cfg["in_res"] // cfg["patch_size"]
    N = hg * hg
    P = sr * sr
    S2 = N + P
    B = batch
    M1, M2 = B * N, B * S2
    L = params["wq"].shape[0]
    le = cfg["num_enc_layers"] - 1         # last encoder layer index
    bf16, f32 = jnp.bfloat16, jnp.float32

    def pad_lanes(a, w=128):
        return jnp.pad(a, [(0, 0)] * (a.ndim - 1) + [(0, w - a.shape[-1])])

    # patch-embed weight with pos-embed rows and patch bias row folded in
    w_embed = jnp.concatenate(
        [params["patch_w"], params["pos_embed"], params["patch_b"]], axis=0).astype(bf16)

    # fused + lane-padded QKV projection: [Wq | Wk | Wv | 0]
    wqkv = pad_lanes(jnp.concatenate(
        [params["wq"], params["wk"], params["wv"]], axis=2)).astype(bf16)
    bqkv = pad_lanes(jnp.concatenate(
        [params["bq"], params["bk"], params["bv"]], axis=2)).astype(f32)

    # output projection padded to 128 contraction rows (attn slab is 128 lanes wide)
    wo = jnp.pad(params["wo"], ((0, 0), (0, 128 - D), (0, 0))).astype(bf16)

    # bottleneck @ decoder_embed folded into the last encoder layer's FFN output
    w_bd = params["bot_w"] @ params["dec_embed_w"]                     # (D, D)
    w2 = params["w2"].at[le].set(params["w2"][le] @ w_bd)
    b2 = params["b2"].at[le].set(params["b2"][le] @ w_bd)

    # last decoder layer writes a lane-dense 128-wide slab
    w2_last = pad_lanes(w2[L - 1]).astype(bf16)                        # (dff, 128)
    b2_last = pad_lanes(b2[L - 1]).astype(f32)                         # (1, 128)

    # decoder-token/pos embed + decoder_embed bias + bottleneck bias: additive const
    rec_const = (params["dec_token"] + params["dec_pos"]) @ params["dec_embed_w"] \
        + params["dec_embed_b"]                                        # (N, D)
    pool_const = params["bot_b"] @ params["dec_embed_w"] + params["dec_embed_b"]
    a_single = jnp.concatenate([rec_const, jnp.tile(pool_const, (P, 1))], axis=0)
    a_full = jnp.tile(a_single, (B, 1)).astype(f32)                    # (M2, D)

    # avg-pool + row scatter as one constant block matrix (exact in bf16)
    k = hg // sr
    pool = np.zeros((P, N), np.float32)
    for n in range(N):
        r, c = divmod(n, hg)
        pool[(r // k) * sr + (c // k), n] = 1.0 / (k * k)
    scatter = np.zeros((M2, M1), np.float32)
    for b in range(B):
        scatter[b * S2 + N:(b + 1) * S2, b * N:(b + 1) * N] = pool

    # per-head lane masks (head h occupies lanes h*dh:(h+1)*dh of the Q slab)
    hmask = np.zeros((H, 1, 128), np.float32)
    for h in range(H):
        hmask[h, 0, h * dh:(h + 1) * dh] = 1.0

    # [identity-tile | ones] tail appended to the patch rows (pos + bias fold)
    aug_tail = np.concatenate(
        [np.tile(np.eye(N, dtype=np.float32), (B, 1)),
         np.ones((M1, 1), np.float32)], axis=1)

    return dict(
        w_embed=w_embed,
        ln=jnp.concatenate([params["ln_w"], params["ln_b"]], axis=0).astype(f32),
        wqkv=wqkv, bqkv=bqkv,
        wo=wo, bo=params["bo"].astype(f32),
        w1=params["w1"].astype(bf16), b1=params["b1"].astype(f32),
        w2=w2.astype(bf16), b2=b2.astype(f32),
        w2_last=w2_last, b2_last=b2_last,
        scatter=jnp.asarray(scatter, bf16),
        a_full=a_full,
        hmask=jnp.asarray(hmask, f32),
        aug_tail=jnp.asarray(aug_tail, f32),
    )


# ----------------------------------------------------------------------------
# forward pass wrapper (single grid-less pallas_call)
# ----------------------------------------------------------------------------
def vit_ae_forward(x, kp, cfg, roll_shifts):
    B, C, Himg, _ = x.shape
    p = cfg["patch_size"]
    D = cfg["hidden_dim"]
    sr = cfg["spatial_res"]
    hg = Himg // p
    N = hg * hg
    S2 = N + sr * sr
    M1, M2 = B * N, B * S2

    # unfold to patches (B*N, C*p*p), (c,u,v) fastest -> matches Conv2d weight layout
    patches = (x.reshape(B, C, hg, p, hg, p)
                 .transpose(0, 2, 4, 1, 3, 5)
                 .reshape(M1, C * p * p))
    x_aug = jnp.concatenate([patches, kp["aug_tail"]], axis=1)

    args = [x_aug, kp["w_embed"], kp["ln"],
            kp["wqkv"], kp["bqkv"], kp["wo"], kp["bo"],
            kp["w1"], kp["b1"], kp["w2"], kp["b2"],
            kp["w2_last"], kp["b2_last"],
            kp["scatter"], kp["a_full"], kp["hmask"]]

    kern = functools.partial(
        _vit_ae_fused_kernel,
        num_heads=cfg["num_heads"],
        num_enc_layers=cfg["num_enc_layers"],
        seq_enc=N, seq_dec=S2, batch=B,
        k_shift=roll_shifts[0], v_shift=roll_shifts[1])

    out = pl.pallas_call(
        kern,
        out_shape=jax.ShapeDtypeStruct((M2, 128), jnp.float32),
        in_specs=[_full_spec(a.shape) for a in args],
        out_specs=_full_spec((M2, 128)),
        compiler_params=pltpu.CompilerParams(vmem_limit_bytes=32 * 1024 * 1024),
    )(*args)

    # drop pooled-token rows and lane padding outside the kernel, 'b (h w) d -> b d h w'
    x_rec = out.reshape(B, S2, 128)[:, :N, :D]
    return x_rec.reshape(B, hg, hg, D).transpose(0, 3, 1, 2)


# ----------------------------------------------------------------------------
# parameter initialisation (deterministic, in-script); layer weights stacked
# ----------------------------------------------------------------------------
def init_params(key, cfg):
    C = cfg["in_channels"]
    p = cfg["patch_size"]
    D = cfg["hidden_dim"]
    Bd = cfg["bottleneck_dim"]
    hg = cfg["in_res"] // p
    N = hg * hg
    dff = int(D * cfg["mlp_ratio"])
    L = cfg["num_enc_layers"] + cfg["num_dec_layers"]

    keys = iter(jax.random.split(key, 8 * L + 16))

    def xavier(k, fi, fo):
        a = math.sqrt(6.0 / (fi + fo))
        return jax.random.uniform(k, (fi, fo), jnp.float32, -a, a)

    def zeros(*s):
        return jnp.zeros(s, jnp.float32)

    wq = jnp.stack([xavier(next(keys), D, D) for _ in range(L)])
    wk = jnp.stack([xavier(next(keys), D, D) for _ in range(L)])
    wv = jnp.stack([xavier(next(keys), D, D) for _ in range(L)])
    wo = jnp.stack([xavier(next(keys), D, D) for _ in range(L)])
    w1 = jnp.stack([xavier(next(keys), D, dff) for _ in range(L)])
    w2 = jnp.stack([xavier(next(keys), dff, D) for _ in range(L)])

    return dict(
        # patch-embed conv (D, C, p, p) stored as (C*p*p, D); kaiming fan_out
        patch_w=jax.random.normal(next(keys), (C * p * p, D), jnp.float32)
        * math.sqrt(2.0 / (D * p * p)),
        patch_b=zeros(1, D),
        pos_embed=jax.random.normal(next(keys), (N, D), jnp.float32) * 0.02,
        ln_w=jnp.ones((1, D), jnp.float32),
        ln_b=zeros(1, D),
        wq=wq, bq=zeros(L, 1, D),
        wk=wk, bk=zeros(L, 1, D),
        wv=wv, bv=zeros(L, 1, D),
        wo=wo, bo=zeros(L, 1, D),
        w1=w1, b1=zeros(L, 1, dff),
        w2=w2, b2=zeros(L, 1, D),
        bot_w=xavier(next(keys), D, Bd), bot_b=zeros(1, Bd),
        dec_pos=jax.random.normal(next(keys), (N, Bd), jnp.float32) * 0.02,
        dec_embed_w=xavier(next(keys), Bd, D), dec_embed_b=zeros(1, D),
        dec_token=jax.random.normal(next(keys), (1, Bd), jnp.float32),
    )


# ----------------------------------------------------------------------------
# pure-JAX reference (original, unfolded op sequence; bf16 at the dots to match
# the kernel's matmul precision) -- validates the host-side constant folding.
# ----------------------------------------------------------------------------
def _reference_forward(x, params, cfg):
    B, C, Himg, _ = x.shape
    ps = cfg["patch_size"]
    D = cfg["hidden_dim"]
    sr = cfg["spatial_res"]
    H = cfg["num_heads"]
    hg = Himg // ps
    N = hg * hg
    dh = D // H
    f32, bf16 = jnp.float32, jnp.bfloat16

    def dot(a, b):
        return jnp.dot(a.astype(bf16), b.astype(bf16), preferred_element_type=f32)

    def ln(v):
        mu = v.mean(-1, keepdims=True)
        var = ((v - mu) ** 2).mean(-1, keepdims=True)
        return (v - mu) * jax.lax.rsqrt(var + 1e-5) * params["ln_w"] + params["ln_b"]

    def gelu(v):
        return 0.5 * v * (1.0 + jnp.tanh(
            0.7978845608028654 * (v + 0.044715 * v * v * v)))

    def attention(v_in, l):
        S = v_in.shape[1]
        q = dot(v_in, params["wq"][l]) + params["bq"][l]
        k = dot(v_in, params["wk"][l]) + params["bk"][l]
        vv = dot(v_in, params["wv"][l]) + params["bv"][l]
        q = q.reshape(B, S, H, dh).transpose(0, 2, 1, 3)
        k = k.reshape(B, S, H, dh).transpose(0, 2, 1, 3)
        vv = vv.reshape(B, S, H, dh).transpose(0, 2, 1, 3)
        s = jnp.einsum("bhqd,bhkd->bhqk", q.astype(bf16), k.astype(bf16),
                       preferred_element_type=f32) / math.sqrt(dh)
        p = jax.nn.softmax(s, axis=-1)
        o = jnp.einsum("bhqk,bhkd->bhqd", p.astype(bf16), vv.astype(bf16),
                       preferred_element_type=f32)
        o = o.transpose(0, 2, 1, 3).reshape(B, S, D)
        return dot(o, params["wo"][l]) + params["bo"][l]

    def ffn(v_in, l):
        h1 = gelu(dot(v_in, params["w1"][l]) + params["b1"][l])
        return dot(h1, params["w2"][l]) + params["b2"][l]

    patches = (x.reshape(B, C, hg, ps, hg, ps)
                 .transpose(0, 2, 4, 1, 3, 5)
                 .reshape(B, N, C * ps * ps))
    h_tok = dot(patches, params["patch_w"]) + params["patch_b"] + params["pos_embed"]
    for l in range(cfg["num_enc_layers"]):
        h_tok = attention(ln(h_tok), l)
        h_tok = ffn(ln(h_tok), l)
    z = dot(h_tok, params["bot_w"]) + params["bot_b"]
    k = hg // sr
    pooled = (z.reshape(B, hg, hg, -1)
                .reshape(B, sr, k, sr, k, -1).mean(axis=(2, 4))
                .reshape(B, sr * sr, -1))
    x_rec = jnp.broadcast_to(params["dec_token"][None], (B, N, params["dec_token"].shape[-1]))
    x_rec = x_rec + params["dec_pos"]
    x_cat = jnp.concatenate([x_rec, pooled], axis=1)
    x_cat = dot(x_cat, params["dec_embed_w"]) + params["dec_embed_b"]
    L = cfg["num_enc_layers"] + cfg["num_dec_layers"]
    for l in range(cfg["num_enc_layers"], L):
        x_cat = attention(ln(x_cat), l)
        x_cat = ffn(ln(x_cat), l)
    x_out = x_cat[:, :N]
    return x_out.reshape(B, hg, hg, D).transpose(0, 3, 1, 2)


# ----------------------------------------------------------------------------
# main
# ----------------------------------------------------------------------------
if __name__ == "__main__":
    cfg = dict(
        in_res=16,
        in_channels=4,
        patch_size=4,
        hidden_dim=32,
        bottleneck_dim=16,
        spatial_res=2,
        num_enc_layers=2,
        num_dec_layers=2,
        num_heads=4,
        mlp_ratio=2.0,
        residual=False,
    )

    key = jax.random.PRNGKey(0)
    k_param, k_x = jax.random.split(key)
    params = init_params(k_param, cfg)
    x = jax.random.normal(
        k_x, (2, cfg["in_channels"], cfg["in_res"], cfg["in_res"]), jnp.float32)

    roll_shifts = _attention_roll_shifts(cfg["hidden_dim"])
    kp = prepare_params(params, cfg, batch=x.shape[0])

    fwd = jax.jit(lambda xx, pp: vit_ae_forward(xx, pp, cfg, roll_shifts))
    out = jax.block_until_ready(fwd(x, kp))

    hg = cfg["in_res"] // cfg["patch_size"]
    expected = (2, cfg["hidden_dim"], hg, hg)
    assert out.shape == expected, (out.shape, expected)
    assert bool(jnp.all(jnp.isfinite(out)))

    # validate fused kernel (and all the host-side folding) against the reference
    ref = _reference_forward(x, params, cfg)
    rel = float(jnp.max(jnp.abs(out - ref)) / (jnp.max(jnp.abs(ref)) + 1e-6))
    assert rel < 8e-2, f"kernel/reference mismatch: rel={rel:.4f}"

    print("KERNEL_OK")
</pallas_src>

<mosaic_0001>
module attributes {stable_mosaic.version = 11 : i64} {
  func.func @probe(%arg0: memref<8x128xf32, #tpu.memory_space<vmem>>, %arg1: memref<8x128xf32, #tpu.memory_space<vmem>>) attributes {dimension_semantics = [], scalar_prefetch = 0 : i64, scratch_operands = 0 : i64, tpu.core_type = #tpu.core_type<tc>} {
    %c0 = arith.constant 0 : index
    %c0_0 = arith.constant 0 : index
    %0 = vector.load %arg0[%c0, %c0_0] : memref<8x128xf32, #tpu.memory_space<vmem>>, vector<8x128xf32>
    %c1_i32 = arith.constant 1 : i32
    %1 = tpu.dynamic_rotate %0 by %c1_i32 dim 1 : vector<8x128xf32>, i32 -> vector<8x128xf32>
    %c0_1 = arith.constant 0 : index
    %c0_2 = arith.constant 0 : index
    %2 = vector.load %arg1[%c0_1, %c0_2] : memref<8x128xf32, #tpu.memory_space<vmem>>, vector<8x128xf32>
    tpu.vector_store %arg1[%c0_1, %c0_2], %1 {strides = array<i32>} : memref<8x128xf32, #tpu.memory_space<vmem>>, vector<8x128xf32>,
    return
  }
}

</mosaic_0001>

<llo_original>
// kernel: tpu_custom_call.1
$region0: #{tpu_custom_call.1}
  #allocation0 [shape = 'u32[]', space=smem, size = 0x4, offset = 0x4, fixed_abs, tag = 'smem constant byte address 0x4 - core index']
  #allocation1 [shape = 'u32[144,128]{1,0:T(1,128)}', space=vmem, size = 0x12000, scoped, tag = 'internal scratch']
  %s0 = inlined_call_operand.hbm [shape: f32[8,128], index: 0, kind: input, shape index: {}]
  %s1 = inlined_call_operand.hbm [shape: f32[8,128], index: 1, kind: output, shape index: {}]
  %s2 = sld [smem:[#allocation0]]
  $region18: #{tpu_custom_call.1} parent=0
    _
  %s4 = ssub.s32 1, %s2
  %s5 = scalar_select 0, %s4, %s2
  $region1: #{tpu_custom_call.1} parent=0
    #allocation2 [shape = 'u8[4096]{0}', space=vmem, size = 0x1000, scoped, tag = 'input window, operand 0, single buffered']
    #allocation3 [shape = 's32[1]{0}', space=sflag, size = 0x4, scoped, tag = 'scoped memory for tpu_custom_call.1']
    #allocation4 [shape = 's32[1]{0}', space=sflag, size = 0x4, scoped, tag = 'scoped memory for tpu_custom_call.1']
    #allocation5 [shape = 'u8[4096]{0}', space=vmem, size = 0x1000, scoped, tag = 'output window, operand 0, single buffered']
    %6 = vsyncpa [#allocation3], 0
    %7 = vsyncpa [#allocation4], 0
    // Predicated region
    $region2: #{tpu_custom_call.1} parent=1 // pred_check
      _
    $region3: #{tpu_custom_call.1} parent=1 // pred_check_branch
      %9 = sbr.rel (0) target = $region5
    $region4: #{tpu_custom_call.1} parent=1 // pred_region
      %s11 = ssub.s32 128, 128
      %12 = vsyncadd [#allocation3], %s11
      %s14 = sshll.u32 [#allocation2], 4
      %s15 = int_to_ptr.vmem [resolvable:$true] %s14
      %17 = dma.hbm_to_vmem [thread:$0]  %s0, 128, %s15, [#allocation3]
    $region5: #{tpu_custom_call.1} parent=1 // pred_fallthru
      _
    // Predicated region
    $region6: #{tpu_custom_call.1} parent=1 // pred_check
      _
    $region7: #{tpu_custom_call.1} parent=1 // pred_check_branch
      %19 = sbr.rel (0) target = $region9
    $region8: #{tpu_custom_call.1} parent=1 // pred_region
      %20 = dma.done [#allocation3], 128
    $region9: #{tpu_custom_call.1} parent=1 // pred_fallthru
      _
    %v21 = vld [vmem:[#allocation2] sm:$0xff]
    %22 = vrot.lane.b32.xlu0 %v21, 1
    %v23 = vpop.permute.xlu0 %22
    %24 = vst [vmem:[#allocation5] sm:$0xff] %v23
    // Predicated region
    $region10: #{tpu_custom_call.1} parent=1 // pred_check
      _
    $region11: #{tpu_custom_call.1} parent=1 // pred_check_branch
      %26 = sbr.rel (0) target = $region13
    $region12: #{tpu_custom_call.1} parent=1 // pred_region
      %s28 = ssub.s32 128, 128
      %29 = vsyncadd [#allocation4], %s28
      %s31 = sshll.u32 [#allocation5], 4
      %s32 = int_to_ptr.vmem [resolvable:$true] %s31
      %34 = dma.vmem_to_hbm [thread:$0]  %s32, 128, %s1, [#allocation4]
    $region13: #{tpu_custom_call.1} parent=1 // pred_fallthru
      _
    // Predicated region
    $region14: #{tpu_custom_call.1} parent=1 // pred_check
      _
    $region15: #{tpu_custom_call.1} parent=1 // pred_check_branch
      %36 = sbr.rel (0) target = $region17
    $region16: #{tpu_custom_call.1} parent=1 // pred_region
      %37 = dma.done [#allocation4], 128
    $region17: #{tpu_custom_call.1} parent=1 // pred_fallthru
      _
    %38 = vsyncpa [#allocation3], 1
    %39 = vsyncpa [#allocation4], 1

</llo_original>
